<compile_context>
chip_gen: v5e
topology: v5e:2x2
jax: 0.10.0
libtpu: 0.0.40
codegen_flags: <defaults>
</compile_context>

<pallas_src>
import functools

import jax
import jax.numpy as jnp
from jax.experimental import pallas as pl
from jax.experimental.pallas import tpu as pltpu


# ------------------------------- kernels -------------------------------------


def _fused_kernel(x_ref, w_ref, b_ref, o_ref, *, inv_m, eps):
    """Single pass: stats + normalize + affine over one (N, c_tile, HW) slab."""
    nb = x_ref.shape[0]
    c_tile = x_ref.shape[1]

    def stats_body(n, carry):
        s, sq = carry
        xf = x_ref[n].astype(jnp.float32)                    # (c_tile, HW)
        s = s + jnp.sum(xf, axis=-1, keepdims=True)
        sq = sq + jnp.sum(xf * xf, axis=-1, keepdims=True)
        return s, sq

    zeros = jnp.zeros((c_tile, 1), jnp.float32)
    s, sq = jax.lax.fori_loop(0, nb, stats_body, (zeros, zeros),
                              unroll=nb <= 8)

    mean = s * inv_m
    # f32 accumulators; clamp guards tiny negatives from cancellation.
    var = jnp.maximum(sq * inv_m - mean * mean, 0.0)
    inv_std = jax.lax.rsqrt(var + eps)
    scale = w_ref[...].astype(jnp.float32) * inv_std         # (c_tile, 1)
    shift = b_ref[...].astype(jnp.float32) - mean * scale

    def apply_body(n, carry):
        xf = x_ref[n].astype(jnp.float32)
        o_ref[n] = (xf * scale + shift).astype(o_ref.dtype)
        return carry

    jax.lax.fori_loop(0, nb, apply_body, 0, unroll=nb <= 8)


def _stats_kernel(x_ref, w_ref, b_ref, scale_ref, shift_ref,
                  sum_ref, sumsq_ref, *, inv_m, eps, hw, hw_tile, mask_hw):
    """Pass 1: accumulate per-channel sum / sum(x^2); finalize scale/shift."""
    n = pl.program_id(1)
    h = pl.program_id(2)
    is_first = jnp.logical_and(n == 0, h == 0)
    is_last = jnp.logical_and(n == pl.num_programs(1) - 1,
                              h == pl.num_programs(2) - 1)

    @pl.when(is_first)
    def _():
        sum_ref[...] = jnp.zeros_like(sum_ref)
        sumsq_ref[...] = jnp.zeros_like(sumsq_ref)

    x = x_ref[...].astype(jnp.float32)          # (n_tile, c_tile, hw_tile)
    if mask_hw:
        lane = jax.lax.broadcasted_iota(jnp.int32, x.shape, dimension=2)
        valid = (h * hw_tile + lane) < hw
        x = jnp.where(valid, x, 0.0)

    # Reduce the batch sub-tile with plain VALU adds, then one lane reduce.
    xs = jnp.sum(x, axis=0)                     # (c_tile, hw_tile)
    xsq = jnp.sum(x * x, axis=0)
    sum_ref[...] += jnp.sum(xs, axis=-1, keepdims=True)
    sumsq_ref[...] += jnp.sum(xsq, axis=-1, keepdims=True)

    @pl.when(is_last)
    def _():
        mean = sum_ref[...] * inv_m
        var = jnp.maximum(sumsq_ref[...] * inv_m - mean * mean, 0.0)
        inv_std = jax.lax.rsqrt(var + eps)
        scale = w_ref[...].astype(jnp.float32) * inv_std
        scale_ref[...] = scale
        shift_ref[...] = b_ref[...].astype(jnp.float32) - mean * scale


def _apply_kernel(x_ref, scale_ref, shift_ref, o_ref):
    """Pass 2: y = x * scale + shift (fully parallel, lane-dense blocks)."""
    x = x_ref[...].astype(jnp.float32)          # (n_tile, c_tile, hw_tile)
    o_ref[...] = (x * scale_ref[...] + shift_ref[...]).astype(o_ref.dtype)


# ------------------------------ planning -------------------------------------


def _physical_vmem_bytes():
    try:
        v = int(pltpu.get_tpu_info().vmem_capacity_bytes)
        if v > 0:
            return v
    except Exception:
        pass
    return 64 * 1024 * 1024     # conservative default (v7x); v5e/v6e have 128 MiB


def _choose_c_tile_fused(C, per_channel_bytes, block_budget, min_tiles=4):
    """Channel tile for the fused path: multiple of 8 dividing C (or C itself)."""
    if C % 8 != 0:
        return C
    cands = [ct for ct in range(8, C + 1, 8) if C % ct == 0]
    fitting = [ct for ct in cands if ct * per_channel_bytes <= block_budget]
    if not fitting:
        return 8
    pref = [ct for ct in fitting if C // ct >= min_tiles]   # keep megacore fed
    return max(pref) if pref else min(fitting)


def _plan_two_pass(N, C, HW, itemsize, block_budget):
    """Pick (n_tile, c_tile, hw_tile) satisfying the (8,128) rule and budget."""
    c_tile = 8 if C % 8 == 0 else C
    lane_cap = max(128, block_budget // max(1, c_tile * itemsize))
    if HW <= lane_cap:
        hw_tile = HW                       # full extent: legal, no masking
        num_h = 1
        mask_hw = False
    else:
        l128 = -(-HW // 128)               # HW in 128-lane groups
        cap128 = max(1, lane_cap // 128)
        num_h = -(-l128 // cap128)
        hw_tile = 128 * (-(-l128 // num_h))    # balanced 128-multiple tiles
        num_h = -(-HW // hw_tile)
        mask_hw = (HW % hw_tile) != 0
    n_cap = max(1, block_budget // max(1, c_tile * hw_tile * itemsize))
    n_tile = 1
    for d in range(min(N, n_cap), 0, -1):
        if N % d == 0:
            n_tile = d
            break
    return n_tile, c_tile, hw_tile, num_h, mask_hw


# ------------------------------ entry point -----------------------------------


def meta_batch_norm2d(x, weight, bias, eps=1e-5, *,
                      force_two_pass=False, block_budget_bytes=None):
    """Training-mode BatchNorm2d forward. x: (N, C, H, W); weight, bias: (C,)."""
    N, C, H, W = x.shape
    HW = H * W
    M = N * HW
    itemsize = jnp.dtype(x.dtype).itemsize

    # Free reshapes only -- no transposes, no extra HBM passes.
    x3 = x.reshape(N, C, HW)
    w2 = weight.reshape(C, 1).astype(jnp.float32)
    b2 = bias.reshape(C, 1).astype(jnp.float32)

    vmem_bytes = _physical_vmem_bytes()
    vmem_limit = int(min(vmem_bytes * 3 // 4, 100 * 1024 * 1024))
    block_budget = (block_budget_bytes if block_budget_bytes is not None
                    else vmem_bytes // 8)

    def _cparams(sem):
        return pltpu.CompilerParams(dimension_semantics=sem,
                                    vmem_limit_bytes=vmem_limit)

    # ---- Fused single-pass path: 1 read + 1 write of x when a slab fits ----
    per_channel_bytes = N * HW * itemsize
    c_tile_f = _choose_c_tile_fused(C, per_channel_bytes, block_budget)
    if (not force_two_pass) and c_tile_f * per_channel_bytes <= block_budget:
        x_spec = pl.BlockSpec((N, c_tile_f, HW), lambda c: (0, c, 0))
        cvec_spec = pl.BlockSpec((c_tile_f, 1), lambda c: (c, 0))
        y3 = pl.pallas_call(
            functools.partial(_fused_kernel, inv_m=1.0 / M, eps=float(eps)),
            out_shape=jax.ShapeDtypeStruct((N, C, HW), x.dtype),
            grid_spec=pltpu.PrefetchScalarGridSpec(
                num_scalar_prefetch=0,
                grid=(C // c_tile_f,),
                in_specs=[x_spec, cvec_spec, cvec_spec],
                out_specs=x_spec),
            compiler_params=_cparams(("parallel",)),
        )(x3, w2, b2)
        return y3.reshape(N, C, H, W)

    # ---- Two-pass path: streaming stats, then lane-dense apply ----
    n_tile, c_tile, hw_tile, num_h, mask_hw = _plan_two_pass(
        N, C, HW, itemsize, block_budget)
    grid = (C // c_tile, N // n_tile, num_h)

    x_spec = pl.BlockSpec((n_tile, c_tile, hw_tile), lambda c, n, h: (n, c, h))
    cvec_spec = pl.BlockSpec((c_tile, 1), lambda c, n, h: (c, 0))

    scale, shift = pl.pallas_call(
        functools.partial(_stats_kernel, inv_m=1.0 / M, eps=float(eps),
                          hw=HW, hw_tile=hw_tile, mask_hw=mask_hw),
        out_shape=(jax.ShapeDtypeStruct((C, 1), jnp.float32),
                   jax.ShapeDtypeStruct((C, 1), jnp.float32)),
        grid_spec=pltpu.PrefetchScalarGridSpec(
            num_scalar_prefetch=0,
            grid=grid,
            in_specs=[x_spec, cvec_spec, cvec_spec],
            out_specs=(cvec_spec, cvec_spec),
            scratch_shapes=[pltpu.VMEM((c_tile, 1), jnp.float32),
                            pltpu.VMEM((c_tile, 1), jnp.float32)]),
        compiler_params=_cparams(("parallel", "arbitrary", "arbitrary")),
    )(x3, w2, b2)

    y3 = pl.pallas_call(
        _apply_kernel,
        out_shape=jax.ShapeDtypeStruct((N, C, HW), x.dtype),
        grid_spec=pltpu.PrefetchScalarGridSpec(
            num_scalar_prefetch=0,
            grid=grid,
            in_specs=[x_spec, cvec_spec, cvec_spec],
            out_specs=x_spec),
        compiler_params=_cparams(("parallel", "parallel", "parallel")),
    )(x3, scale, shift)

    return y3.reshape(N, C, H, W)


# --------------------------------- test ---------------------------------------


def _reference(x, weight, bias, eps):
    C = x.shape[1]
    mean = jnp.mean(x, axis=(0, 2, 3), keepdims=True)
    var = jnp.mean(jnp.square(x - mean), axis=(0, 2, 3), keepdims=True)
    y = (x - mean) / jnp.sqrt(var + eps)
    return y * weight.reshape(1, C, 1, 1) + bias.reshape(1, C, 1, 1)


if __name__ == "__main__":
    key = jax.random.PRNGKey(0)
    eps = 1e-5

    # --- Shape 1: (2, 4, 16, 16), HW 128-aligned ---
    k1, k2, k3, k4, k5, k6 = jax.random.split(key, 6)
    x1 = jax.random.normal(k1, (2, 4, 16, 16), dtype=jnp.float32) * 2.0 + 0.5
    w1 = jnp.ones((4,), jnp.float32) + 0.1 * jax.random.normal(k2, (4,), jnp.float32)
    b1 = 0.1 * jax.random.normal(k3, (4,), jnp.float32)
    ref1 = _reference(x1, w1, b1, eps)

    y1_fused = jax.block_until_ready(meta_batch_norm2d(x1, w1, b1, eps=eps))
    y1_2pass = jax.block_until_ready(
        meta_batch_norm2d(x1, w1, b1, eps=eps, force_two_pass=True))

    assert y1_fused.shape == x1.shape and y1_fused.dtype == x1.dtype
    assert jnp.allclose(y1_fused, ref1, atol=1e-4, rtol=1e-4)
    assert jnp.allclose(y1_2pass, ref1, atol=1e-4, rtol=1e-4)

    # --- Shape 2: (2, 8, 12, 12), HW not 128-aligned (exercises tail masking) ---
    x2 = jax.random.normal(k4, (2, 8, 12, 12), dtype=jnp.float32) * 1.5 - 0.3
    w2 = jnp.ones((8,), jnp.float32) + 0.1 * jax.random.normal(k5, (8,), jnp.float32)
    b2 = 0.1 * jax.random.normal(k6, (8,), jnp.float32)
    ref2 = _reference(x2, w2, b2, eps)

    y2_fused = jax.block_until_ready(meta_batch_norm2d(x2, w2, b2, eps=eps))
    # Tiny forced budget => two-pass with 128-wide tiles + ragged-tail masking.
    y2_2pass = jax.block_until_ready(
        meta_batch_norm2d(x2, w2, b2, eps=eps,
                          force_two_pass=True, block_budget_bytes=4096))

    assert y2_fused.shape == x2.shape and y2_fused.dtype == x2.dtype
    assert jnp.allclose(y2_fused, ref2, atol=1e-4, rtol=1e-4)
    assert jnp.allclose(y2_2pass, ref2, atol=1e-4, rtol=1e-4)

    print("KERNEL_OK")
</pallas_src>

<mosaic_0001>
module attributes {stable_mosaic.version = 11 : i64} {
  func.func @_fused_kernel(%arg0: i32, %arg1: memref<2x4x256xf32, #tpu.memory_space<vmem>>, %arg2: memref<4x1xf32, #tpu.memory_space<vmem>>, %arg3: memref<4x1xf32, #tpu.memory_space<vmem>>, %arg4: memref<2x4x256xf32, #tpu.memory_space<vmem>>) attributes {dimension_semantics = [#tpu.dimension_semantics<parallel>], iteration_bounds = array<i64: 1>, scalar_prefetch = 0 : i64, scratch_operands = 0 : i64, tpu.core_type = #tpu.core_type<tc>, window_params = [{transform_indices = @transform_0, window_bounds = array<i64: 2, 4, 256>}, {transform_indices = @transform_1, window_bounds = array<i64: 4, 1>}, {transform_indices = @transform_2, window_bounds = array<i64: 4, 1>}, {transform_indices = @transform_3, window_bounds = array<i64: 2, 4, 256>}]} {
    %cst = arith.constant 0.000000e+00 : f32
    %0 = vector.broadcast %cst : f32 to vector<4x1xf32>
    %c0_i32 = arith.constant 0 : i32
    %1 = arith.index_cast %c0_i32 : i32 to index
    %c0 = arith.constant 0 : index
    %c0_0 = arith.constant 0 : index
    %2 = vector.load %arg1[%1, %c0, %c0_0] : memref<2x4x256xf32, #tpu.memory_space<vmem>>, vector<1x4x256xf32>
    %3 = vector.shape_cast %2 : vector<1x4x256xf32> to vector<4x256xf32>
    %cst_1 = arith.constant dense<0.000000e+00> : vector<4xf32>
    %4 = vector.multi_reduction <add>, %3, %cst_1 [1] : vector<4x256xf32> to vector<4xf32>
    %5 = vector.shape_cast %4 : vector<4xf32> to vector<4x1xf32>
    %6 = arith.addf %0, %5 : vector<4x1xf32>
    %7 = arith.mulf %3, %3 : vector<4x256xf32>
    %cst_2 = arith.constant dense<0.000000e+00> : vector<4xf32>
    %8 = vector.multi_reduction <add>, %7, %cst_2 [1] : vector<4x256xf32> to vector<4xf32>
    %9 = vector.shape_cast %8 : vector<4xf32> to vector<4x1xf32>
    %10 = arith.addf %0, %9 : vector<4x1xf32>
    %c1_i32 = arith.constant 1 : i32
    %11 = arith.index_cast %c1_i32 : i32 to index
    %c0_3 = arith.constant 0 : index
    %c0_4 = arith.constant 0 : index
    %12 = vector.load %arg1[%11, %c0_3, %c0_4] : memref<2x4x256xf32, #tpu.memory_space<vmem>>, vector<1x4x256xf32>
    %13 = vector.shape_cast %12 : vector<1x4x256xf32> to vector<4x256xf32>
    %cst_5 = arith.constant dense<0.000000e+00> : vector<4xf32>
    %14 = vector.multi_reduction <add>, %13, %cst_5 [1] : vector<4x256xf32> to vector<4xf32>
    %15 = vector.shape_cast %14 : vector<4xf32> to vector<4x1xf32>
    %16 = arith.addf %6, %15 : vector<4x1xf32>
    %17 = arith.mulf %13, %13 : vector<4x256xf32>
    %cst_6 = arith.constant dense<0.000000e+00> : vector<4xf32>
    %18 = vector.multi_reduction <add>, %17, %cst_6 [1] : vector<4x256xf32> to vector<4xf32>
    %19 = vector.shape_cast %18 : vector<4xf32> to vector<4x1xf32>
    %20 = arith.addf %10, %19 : vector<4x1xf32>
    %c2_i32 = arith.constant 2 : i32
    %cst_7 = arith.constant 0.001953125 : f32
    %21 = vector.broadcast %cst_7 : f32 to vector<4x1xf32>
    %22 = arith.mulf %16, %21 : vector<4x1xf32>
    %cst_8 = arith.constant 0.001953125 : f32
    %23 = vector.broadcast %cst_8 : f32 to vector<4x1xf32>
    %24 = arith.mulf %20, %23 : vector<4x1xf32>
    %25 = arith.mulf %22, %22 : vector<4x1xf32>
    %26 = arith.subf %24, %25 : vector<4x1xf32>
    %cst_9 = arith.constant 0.000000e+00 : f32
    %27 = vector.broadcast %cst_9 : f32 to vector<4x1xf32>
    %28 = arith.maximumf %26, %27 : vector<4x1xf32>
    %cst_10 = arith.constant 9.99999974E-6 : f32
    %29 = vector.broadcast %cst_10 : f32 to vector<4x1xf32>
    %30 = arith.addf %28, %29 : vector<4x1xf32>
    %31 = math.rsqrt %30 : vector<4x1xf32>
    %c0_11 = arith.constant 0 : index
    %c0_12 = arith.constant 0 : index
    %32 = vector.load %arg2[%c0_11, %c0_12] : memref<4x1xf32, #tpu.memory_space<vmem>>, vector<4x1xf32>
    %33 = arith.mulf %32, %31 : vector<4x1xf32>
    %c0_13 = arith.constant 0 : index
    %c0_14 = arith.constant 0 : index
    %34 = vector.load %arg3[%c0_13, %c0_14] : memref<4x1xf32, #tpu.memory_space<vmem>>, vector<4x1xf32>
    %35 = arith.mulf %22, %33 : vector<4x1xf32>
    %36 = arith.subf %34, %35 : vector<4x1xf32>
    %c0_i32_15 = arith.constant 0 : i32
    %37 = arith.index_cast %c0_i32_15 : i32 to index
    %c0_16 = arith.constant 0 : index
    %c0_17 = arith.constant 0 : index
    %38 = vector.load %arg1[%37, %c0_16, %c0_17] : memref<2x4x256xf32, #tpu.memory_space<vmem>>, vector<1x4x256xf32>
    %39 = vector.shape_cast %38 : vector<1x4x256xf32> to vector<4x256xf32>
    %40 = vector.broadcast %33 : vector<4x1xf32> to vector<4x256xf32>
    %41 = arith.mulf %39, %40 : vector<4x256xf32>
    %42 = vector.broadcast %36 : vector<4x1xf32> to vector<4x256xf32>
    %43 = arith.addf %41, %42 : vector<4x256xf32>
    %44 = arith.index_cast %c0_i32_15 : i32 to index
    %c0_18 = arith.constant 0 : index
    %c0_19 = arith.constant 0 : index
    %45 = vector.load %arg4[%44, %c0_18, %c0_19] : memref<2x4x256xf32, #tpu.memory_space<vmem>>, vector<1x4x256xf32>
    %46 = vector.shape_cast %45 : vector<1x4x256xf32> to vector<4x256xf32>
    %47 = vector.shape_cast %43 : vector<4x256xf32> to vector<1x4x256xf32>
    tpu.vector_store %arg4[%44, %c0_18, %c0_19], %47 {strides = array<i32>} : memref<2x4x256xf32, #tpu.memory_space<vmem>>, vector<1x4x256xf32>,
    %c1_i32_20 = arith.constant 1 : i32
    %48 = arith.index_cast %c1_i32_20 : i32 to index
    %c0_21 = arith.constant 0 : index
    %c0_22 = arith.constant 0 : index
    %49 = vector.load %arg1[%48, %c0_21, %c0_22] : memref<2x4x256xf32, #tpu.memory_space<vmem>>, vector<1x4x256xf32>
    %50 = vector.shape_cast %49 : vector<1x4x256xf32> to vector<4x256xf32>
    %51 = vector.broadcast %33 : vector<4x1xf32> to vector<4x256xf32>
    %52 = arith.mulf %50, %51 : vector<4x256xf32>
    %53 = vector.broadcast %36 : vector<4x1xf32> to vector<4x256xf32>
    %54 = arith.addf %52, %53 : vector<4x256xf32>
    %55 = arith.index_cast %c1_i32_20 : i32 to index
    %c0_23 = arith.constant 0 : index
    %c0_24 = arith.constant 0 : index
    %56 = vector.load %arg4[%55, %c0_23, %c0_24] : memref<2x4x256xf32, #tpu.memory_space<vmem>>, vector<1x4x256xf32>
    %57 = vector.shape_cast %56 : vector<1x4x256xf32> to vector<4x256xf32>
    %58 = vector.shape_cast %54 : vector<4x256xf32> to vector<1x4x256xf32>
    tpu.vector_store %arg4[%55, %c0_23, %c0_24], %58 {strides = array<i32>} : memref<2x4x256xf32, #tpu.memory_space<vmem>>, vector<1x4x256xf32>,
    %c2_i32_25 = arith.constant 2 : i32
    return
  }
  func.func @transform_0(%arg0: i32) -> (i32, i32, i32) {
    %c0_i32 = arith.constant 0 : i32
    %c0_i32_0 = arith.constant 0 : i32
    %c0_i32_1 = arith.constant 0 : i32
    return %c0_i32, %arg0, %c0_i32_0 : i32, i32, i32
  }
  func.func @transform_1(%arg0: i32) -> (i32, i32) {
    %c0_i32 = arith.constant 0 : i32
    %c0_i32_0 = arith.constant 0 : i32
    return %arg0, %c0_i32 : i32, i32
  }
  func.func @transform_2(%arg0: i32) -> (i32, i32) {
    %c0_i32 = arith.constant 0 : i32
    %c0_i32_0 = arith.constant 0 : i32
    return %arg0, %c0_i32 : i32, i32
  }
  func.func @transform_3(%arg0: i32) -> (i32, i32, i32) {
    %c0_i32 = arith.constant 0 : i32
    %c0_i32_0 = arith.constant 0 : i32
    %c0_i32_1 = arith.constant 0 : i32
    return %c0_i32, %arg0, %c0_i32_0 : i32, i32, i32
  }
}

</mosaic_0001>

<llo_original>
// kernel: tpu_custom_call.1
$region0: #{tpu_custom_call.1}
  #allocation0 [shape = 'u32[]', space=smem, size = 0x4, offset = 0x4, fixed_abs, tag = 'smem constant byte address 0x4 - core index']
  #allocation1 [shape = 'u32[72,128]{1,0:T(1,128)}', space=vmem, size = 0x9000, scoped, tag = 'internal scratch']
  %s0 = inlined_call_operand.hbm [shape: f32[2,4,256], index: 0, kind: input, shape index: {}]
  %s1 = inlined_call_operand.vmem [shape: f32[4,1], index: 1, kind: input, shape index: {}]
  %s2 = inlined_call_operand.vmem [shape: f32[4,1], index: 2, kind: input, shape index: {}]
  %s3 = inlined_call_operand.hbm [shape: f32[2,4,256], index: 3, kind: output, shape index: {}]
  %s4 = sld [smem:[#allocation0]]
  $region26: #{tpu_custom_call.1} parent=0
    _
  %s6 = ssub.s32 1, %s4
  %s7 = scalar_select 0, %s6, %s4
  $region1: #{tpu_custom_call.1} parent=0
    #allocation2 [shape = 'u8[8192]{0}', space=vmem, size = 0x2000, scoped, tag = 'input window, operand 0, single buffered']
    #allocation3 [shape = 's32[1]{0}', space=sflag, size = 0x4, scoped, tag = 'scoped memory for tpu_custom_call.1']
    #allocation4 [shape = 's32[1]{0}', space=sflag, size = 0x4, scoped, tag = 'scoped memory for tpu_custom_call.1']
    #allocation5 [shape = 'u8[8192]{0}', space=vmem, size = 0x2000, scoped, tag = 'output window, operand 0, single buffered']
    %8 = vsyncpa [#allocation3], 0
    %9 = vsyncpa [#allocation4], 0
    // Predicated region
    $region2: #{tpu_custom_call.1} parent=1 // pred_check
      _
    $region3: #{tpu_custom_call.1} parent=1 // pred_check_branch
      %11 = sbr.rel (0) target = $region5
    $region4: #{tpu_custom_call.1} parent=1 // pred_region
      %13 = vsyncadd [#allocation3], 0
      %s14 = sshll.u32 %s0, 4
      %s15 = int_to_ptr.hbm [resolvable:$true] %s14
      %s16 = sshll.u32 [#allocation2], 4
      %s17 = int_to_ptr.vmem [resolvable:$true] %s16
      %22 = dma.hbm_to_vmem [thread:$0]  %s15, 256, %s17, [#allocation3], 128, 128, 8
    $region5: #{tpu_custom_call.1} parent=1 // pred_fallthru
      _
    // Predicated region
    $region6: #{tpu_custom_call.1} parent=1 // pred_check
      _
    $region7: #{tpu_custom_call.1} parent=1 // pred_check_branch
      %24 = sbr.rel (0) target = $region9
    $region8: #{tpu_custom_call.1} parent=1 // pred_region
      _
    $region9: #{tpu_custom_call.1} parent=1 // pred_fallthru
      _
    // Predicated region
    $region10: #{tpu_custom_call.1} parent=1 // pred_check
      _
    $region11: #{tpu_custom_call.1} parent=1 // pred_check_branch
      %26 = sbr.rel (0) target = $region13
    $region12: #{tpu_custom_call.1} parent=1 // pred_region
      _
    $region13: #{tpu_custom_call.1} parent=1 // pred_fallthru
      _
    // Predicated region
    $region14: #{tpu_custom_call.1} parent=1 // pred_check
      _
    $region15: #{tpu_custom_call.1} parent=1 // pred_check_branch
      %28 = sbr.rel (0) target = $region17
    $region16: #{tpu_custom_call.1} parent=1 // pred_region
      %30 = dma.done [#allocation3], 256
    $region17: #{tpu_custom_call.1} parent=1 // pred_fallthru
      _
    %v31 = vld [vmem:[#allocation2] sm:$0xff]
    %33 = vst [vmem:[#allocation1] ss:$2 sm:$0xff] %v31
    %v34 = vld.sshfl [vmem:[#allocation1] sm:$0xff pattern:$0x75316420]
    %v35 = vld.sshfl [vmem:[#allocation1 + $0x8] sm:$0xff pattern:$0x75316420]
    %vm38 = vcmask 1043456
    %v39 = vsel %vm38, %v34, 0.0
    %v40 = vsel %vm38, %v35, 0.0
    %v41 = vadd.f32 %v39, %v40
    %42 = vadd.xlane.f32.xlu0 %v41
    %v43 = vpop.xlane.xlu0 %42
    %v44 = vadd.f32 %v43, 0.0
    %v45 = vmul.f32 %v31, %v31
    %47 = vst [vmem:[#allocation1] ss:$2 sm:$0xff] %v45
    %v48 = vld.sshfl [vmem:[#allocation1] sm:$0xff pattern:$0x75316420]
    %v49 = vld.sshfl [vmem:[#allocation1 + $0x8] sm:$0xff pattern:$0x75316420]
    %v52 = vsel %vm38, %v48, 0.0
    %v53 = vsel %vm38, %v49, 0.0
    %v54 = vadd.f32 %v52, %v53
    %55 = vadd.xlane.f32.xlu0 %v54
    %v56 = vpop.xlane.xlu0 %55
    %v57 = vadd.f32 %v56, 0.0
    %s58 = scalar_lea.vmem [#allocation2], 8
    %v59 = vld [vmem:[%s58] sm:$0xff]
    %61 = vst [vmem:[#allocation1] ss:$2 sm:$0xff] %v59
    %v62 = vld.sshfl [vmem:[#allocation1] sm:$0xff pattern:$0x75316420]
    %v63 = vld.sshfl [vmem:[#allocation1 + $0x8] sm:$0xff pattern:$0x75316420]
    %v66 = vsel %vm38, %v62, 0.0
    %v67 = vsel %vm38, %v63, 0.0
    %v68 = vadd.f32 %v66, %v67
    %69 = vadd.xlane.f32.xlu0 %v68
    %v70 = vpop.xlane.xlu0 %69
    %v71 = vadd.f32 %v44, %v70
    %v72 = vmul.f32 %v59, %v59
    %74 = vst [vmem:[#allocation1] ss:$2 sm:$0xff] %v72
    %v75 = vld.sshfl [vmem:[#allocation1] sm:$0xff pattern:$0x75316420]
    %v76 = vld.sshfl [vmem:[#allocation1 + $0x8] sm:$0xff pattern:$0x75316420]
    %v79 = vsel %vm38, %v75, 0.0
    %v80 = vsel %vm38, %v76, 0.0
    %v81 = vadd.f32 %v79, %v80
    %82 = vadd.xlane.f32.xlu0 %v81
    %v83 = vpop.xlane.xlu0 %82
    %v84 = vadd.f32 %v57, %v83
    %v85 = vmul.f32 %v71, 0.001953125
    %v86 = vmul.f32 %v84, 0.001953125
    %v87 = vmul.f32 %v85, %v85
    %v88 = vsub.f32 %v86, %v87
    %v89 = vmax.f32 %v88, 0.0
    %v90 = vadd.f32 %v89, 1e-05
    %v91 = vrsqrt.pop %v90
    %v92 = vmul.f32 %v91, %v90
    %v93 = vmul.f32 %v92, %v91
    %v94 = vmul.f32 0.5, %v93
    %v95 = vsub.f32 1.5, %v94
    %v96 = vmul.f32 %v91, %v95
    %vm97 = vweird.f32 %v90
    %vm98 = vweird.f32 %v91
    %vm99 = vmor %vm97, %vm98
    %v100 = vsel %vm99, %v91, %v96
    %v101 = vld [vmem:[%s1] sm:$0xf]
    %v102 = vmul.f32 %v101, %v100
    %v103 = vld [vmem:[%s2] sm:$0xf]
    %v104 = vmul.f32 %v85, %v102
    %v105 = vsub.f32 %v103, %v104
    %107 = vset.pattern.permute.xlu0 0
    %108 = vperm.xlu0 %107, %v102
    %v109 = vpop.permute.xlu0 %108
    %v111 = vunpack.c.l.s4 839922192
    %v112 = vunpack.c.0.s8 %v111
    %v113 = vperm.slane %v109, %v112
    %v115 = vmul.f32 %v31, %v113
    %117 = vset.pattern.permute.xlu0 0
    %118 = vperm.xlu0 %117, %v105
    %v119 = vpop.permute.xlu0 %118
    %v121 = vunpack.c.l.s4 839922192
    %v122 = vunpack.c.0.s8 %v121
    %v123 = vperm.slane %v119, %v122
    %v125 = vadd.f32 %v115, %v123
    %126 = vst [vmem:[#allocation5] sm:$0xff] %v125
    %v127 = vld [vmem:[%s58] sm:$0xff]
    %v128 = vmul.f32 %v127, %v113
    %v129 = vadd.f32 %v128, %v123
    %s130 = scalar_lea.vmem [#allocation5], 8
    %131 = vst [vmem:[%s130] sm:$0xff] %v129
    // Predicated region
    $region18: #{tpu_custom_call.1} parent=1 // pred_check
      _
    $region19: #{tpu_custom_call.1} parent=1 // pred_check_branch
      %133 = sbr.rel (0) target = $region21
    $region20: #{tpu_custom_call.1} parent=1 // pred_region
      %135 = vsyncadd [#allocation4], 0
      %s136 = sshll.u32 [#allocation5], 4
      %s137 = int_to_ptr.vmem [resolvable:$true] %s136
      %s138 = sshll.u32 %s3, 4
      %s139 = int_to_ptr.hbm [resolvable:$true] %s138
      %144 = dma.vmem_to_hbm [thread:$0]  %s137, 256, %s139, [#allocation4], 128, 128, 8
    $region21: #{tpu_custom_call.1} parent=1 // pred_fallthru
      _
    // Predicated region
    $region22: #{tpu_custom_call.1} parent=1 // pred_check
      _
    $region23: #{tpu_custom_call.1} parent=1 // pred_check_branch
      %146 = sbr.rel (0) target = $region25
    $region24: #{tpu_custom_call.1} parent=1 // pred_region
      %148 = dma.done [#allocation4], 256
    $region25: #{tpu_custom_call.1} parent=1 // pred_fallthru
      _
    %149 = vsyncpa [#allocation3], 1
    %150 = vsyncpa [#allocation4], 1

</llo_original>
